<compile_context>
chip_gen: v5e
topology: v5e:2x2
jax: 0.10.0
libtpu: 0.0.40
codegen_flags: <defaults>
</compile_context>

<pallas_src>
import jax
import jax.numpy as jnp
from jax.experimental import pallas as pl
from jax.experimental.pallas import tpu as pltpu


def _round_up(n, m):
    return ((n + m - 1) // m) * m


def dnn_kernel(xT_ref, w1t_ref, b1t_ref, w2t_ref, b2t_ref, w3t_ref, b3t_ref, o_ref):
    cd = xT_ref.dtype  # compute dtype fed to the MXU (f32 or bf16)
    # Layer 1: (64, 8) @ (8, TB) -> (64, TB), f32 accumulation.
    h1 = jnp.dot(w1t_ref[...], xT_ref[...], preferred_element_type=jnp.float32)
    h1 = jnp.maximum(h1 + b1t_ref[...], 0.0)
    # Layer 2: (32, 64) @ (64, TB) -> (32, TB)
    h2 = jnp.dot(w2t_ref[...], h1.astype(cd), preferred_element_type=jnp.float32)
    h2 = jnp.maximum(h2 + b2t_ref[...], 0.0)
    # Layer 3: (3, 32) @ (32, TB) -> (3, TB), lane-dense store.
    out = jnp.dot(w3t_ref[...], h2.astype(cd), preferred_element_type=jnp.float32)
    o_ref[...] = (out + b3t_ref[...]).astype(o_ref.dtype)


def dnn_forward(x, params, *, tile_b=2048, compute_dtype=jnp.float32):
    """x: (B, 6) float32. Returns (B, 3) float32 (same semantics as the torch module)."""
    w1, b1, w2, b2, w3, b3 = params
    B = x.shape[0]

    # Batch tile: multiple of 128 (lane width); don't exceed the (padded) batch.
    tb = min(tile_b, _round_up(B, 128))
    b_pad = _round_up(B, tb)
    grid = (b_pad // tb,)

    # Feature-major layout: x -> (8, b_pad); batch zero-padded to b_pad,
    # features zero-padded 6 -> 8 (zeros don't change the result).
    xT = jnp.pad(x.astype(compute_dtype), ((0, b_pad - B), (0, 2))).T
    # Transposed weights; layer-1 contraction dim zero-padded 6 -> 8.
    w1t = jnp.pad(w1.T.astype(compute_dtype), ((0, 0), (0, 2)))  # (64, 8)
    w2t = w2.T.astype(compute_dtype)                             # (32, 64)
    w3t = w3.T.astype(compute_dtype)                             # (3, 32)
    b1t = b1.reshape(64, 1).astype(jnp.float32)
    b2t = b2.reshape(32, 1).astype(jnp.float32)
    b3t = b3.reshape(3, 1).astype(jnp.float32)

    const = lambda i: (0, 0)  # weights/biases stay resident across grid steps
    outT = pl.pallas_call(
        dnn_kernel,
        out_shape=jax.ShapeDtypeStruct((3, b_pad), jnp.float32),
        grid=grid,
        in_specs=[
            pl.BlockSpec((8, tb), lambda i: (0, i)),   # xT: batch-tiled, lane-dense
            pl.BlockSpec((64, 8), const),
            pl.BlockSpec((64, 1), const),
            pl.BlockSpec((32, 64), const),
            pl.BlockSpec((32, 1), const),
            pl.BlockSpec((3, 32), const),
            pl.BlockSpec((3, 1), const),
        ],
        out_specs=pl.BlockSpec((3, tb), lambda i: (0, i)),  # lane-dense output
        compiler_params=pltpu.CompilerParams(
            dimension_semantics=("parallel",),  # megacore-shard batch on v7x
        ),
    )(xT, w1t, b1t, w2t, b2t, w3t, b3t)

    return outT[:, :B].T.astype(x.dtype)  # (B, 3)


def init_params(key):
    # Deterministic init mimicking nn.Linear's U(-1/sqrt(fan_in), 1/sqrt(fan_in)).
    def linear(key, fan_in, fan_out):
        kw, kb = jax.random.split(key)
        bound = 1.0 / jnp.sqrt(fan_in)
        w = jax.random.uniform(kw, (fan_in, fan_out), jnp.float32, -bound, bound)
        b = jax.random.uniform(kb, (1, fan_out), jnp.float32, -bound, bound)
        return w, b

    k1, k2, k3 = jax.random.split(key, 3)
    w1, b1 = linear(k1, 6, 64)
    w2, b2 = linear(k2, 64, 32)
    w3, b3 = linear(k3, 32, 3)
    return (w1, b1, w2, b2, w3, b3)


def reference_forward(x, params, compute_dtype=jnp.float32):
    # Pure-JAX reference mirroring the kernel's numerics: matmul inputs rounded
    # to compute_dtype, f32 accumulation, f32 bias add + ReLU.
    w1, b1, w2, b2, w3, b3 = params

    def mm(a, w):
        return jnp.dot(a.astype(compute_dtype).astype(jnp.float32),
                       w.astype(compute_dtype).astype(jnp.float32))

    h1 = jnp.maximum(mm(x, w1) + b1, 0.0)
    h2 = jnp.maximum(mm(h1, w2) + b2, 0.0)
    return mm(h2, w3) + b3


if __name__ == "__main__":
    key = jax.random.PRNGKey(0)
    kx, kx2, kp = jax.random.split(key, 3)
    params = init_params(kp)

    # Small batch, f32 path (single grid step).
    B = 8
    x = jax.random.normal(kx, (B, 6), dtype=jnp.float32)
    out = jax.block_until_ready(dnn_forward(x, params))
    ref = reference_forward(x, params)
    assert out.shape == (B, 3), out.shape
    assert jnp.allclose(out, ref, atol=1e-5, rtol=1e-5), "f32 mismatch vs reference"

    # Larger, non-multiple-of-tile batch exercising the grid (grid=(4,)) and padding.
    B2 = 1000
    x2 = jax.random.normal(kx2, (B2, 6), dtype=jnp.float32)
    out2 = jax.block_until_ready(dnn_forward(x2, params, tile_b=256))
    ref2 = reference_forward(x2, params)
    assert out2.shape == (B2, 3), out2.shape
    assert jnp.allclose(out2, ref2, atol=1e-5, rtol=1e-5), "grid f32 mismatch"

    # bf16 compute path (recommended at large B: kernel is HBM-bound, not MXU-bound).
    out_bf16 = jax.block_until_ready(
        dnn_forward(x2, params, tile_b=256, compute_dtype=jnp.bfloat16))
    ref_bf16 = reference_forward(x2, params, compute_dtype=jnp.bfloat16)
    assert out_bf16.shape == (B2, 3), out_bf16.shape
    assert jnp.allclose(out_bf16, ref_bf16, atol=2e-2, rtol=2e-2), "bf16 mismatch"

    print("KERNEL_OK")
</pallas_src>

<mosaic_0001>
module attributes {stable_mosaic.version = 11 : i64} {
  func.func @dnn_kernel(%arg0: i32, %arg1: memref<8x128xf32, #tpu.memory_space<vmem>>, %arg2: memref<64x8xf32, #tpu.memory_space<vmem>>, %arg3: memref<64x1xf32, #tpu.memory_space<vmem>>, %arg4: memref<32x64xf32, #tpu.memory_space<vmem>>, %arg5: memref<32x1xf32, #tpu.memory_space<vmem>>, %arg6: memref<3x32xf32, #tpu.memory_space<vmem>>, %arg7: memref<3x1xf32, #tpu.memory_space<vmem>>, %arg8: memref<3x128xf32, #tpu.memory_space<vmem>>) attributes {dimension_semantics = [#tpu.dimension_semantics<parallel>], iteration_bounds = array<i64: 1>, scalar_prefetch = 0 : i64, scratch_operands = 0 : i64, tpu.core_type = #tpu.core_type<tc>, window_params = [{transform_indices = @transform_0, window_bounds = array<i64: 8, 128>}, {pipeline_mode = #tpu.pipeline_mode<synchronous>, transform_indices = @transform_1, window_bounds = array<i64: 64, 8>}, {pipeline_mode = #tpu.pipeline_mode<synchronous>, transform_indices = @transform_2, window_bounds = array<i64: 64, 1>}, {pipeline_mode = #tpu.pipeline_mode<synchronous>, transform_indices = @transform_3, window_bounds = array<i64: 32, 64>}, {pipeline_mode = #tpu.pipeline_mode<synchronous>, transform_indices = @transform_4, window_bounds = array<i64: 32, 1>}, {pipeline_mode = #tpu.pipeline_mode<synchronous>, transform_indices = @transform_5, window_bounds = array<i64: 3, 32>}, {pipeline_mode = #tpu.pipeline_mode<synchronous>, transform_indices = @transform_6, window_bounds = array<i64: 3, 1>}, {transform_indices = @transform_7, window_bounds = array<i64: 3, 128>}]} {
    %c0 = arith.constant 0 : index
    %c0_0 = arith.constant 0 : index
    %0 = vector.load %arg2[%c0, %c0_0] : memref<64x8xf32, #tpu.memory_space<vmem>>, vector<64x8xf32>
    %c0_1 = arith.constant 0 : index
    %c0_2 = arith.constant 0 : index
    %1 = vector.load %arg1[%c0_1, %c0_2] : memref<8x128xf32, #tpu.memory_space<vmem>>, vector<8x128xf32>
    %cst = arith.constant dense<0.000000e+00> : vector<64x128xf32>
    %2 = tpu.matmul %0, %1, %cst {dimension_numbers = #tpu.dot_dimension_numbers<[1], [0], [0], [1], [0, 0, 1, 1], [], []>} : vector<64x8xf32>, vector<8x128xf32>, vector<64x128xf32> -> vector<64x128xf32>
    %c0_3 = arith.constant 0 : index
    %c0_4 = arith.constant 0 : index
    %3 = vector.load %arg3[%c0_3, %c0_4] : memref<64x1xf32, #tpu.memory_space<vmem>>, vector<64x1xf32>
    %4 = vector.broadcast %3 : vector<64x1xf32> to vector<64x128xf32>
    %5 = arith.addf %2, %4 : vector<64x128xf32>
    %cst_5 = arith.constant 0.000000e+00 : f32
    %6 = vector.broadcast %cst_5 : f32 to vector<64x128xf32>
    %7 = arith.maximumf %5, %6 : vector<64x128xf32>
    %c0_6 = arith.constant 0 : index
    %c0_7 = arith.constant 0 : index
    %8 = vector.load %arg4[%c0_6, %c0_7] : memref<32x64xf32, #tpu.memory_space<vmem>>, vector<32x64xf32>
    %cst_8 = arith.constant dense<0.000000e+00> : vector<32x128xf32>
    %9 = tpu.matmul %8, %7, %cst_8 {dimension_numbers = #tpu.dot_dimension_numbers<[1], [0], [0], [1], [0, 0, 1, 1], [], []>} : vector<32x64xf32>, vector<64x128xf32>, vector<32x128xf32> -> vector<32x128xf32>
    %c0_9 = arith.constant 0 : index
    %c0_10 = arith.constant 0 : index
    %10 = vector.load %arg5[%c0_9, %c0_10] : memref<32x1xf32, #tpu.memory_space<vmem>>, vector<32x1xf32>
    %11 = vector.broadcast %10 : vector<32x1xf32> to vector<32x128xf32>
    %12 = arith.addf %9, %11 : vector<32x128xf32>
    %cst_11 = arith.constant 0.000000e+00 : f32
    %13 = vector.broadcast %cst_11 : f32 to vector<32x128xf32>
    %14 = arith.maximumf %12, %13 : vector<32x128xf32>
    %c0_12 = arith.constant 0 : index
    %c0_13 = arith.constant 0 : index
    %15 = vector.load %arg6[%c0_12, %c0_13] : memref<3x32xf32, #tpu.memory_space<vmem>>, vector<3x32xf32>
    %cst_14 = arith.constant dense<0.000000e+00> : vector<3x128xf32>
    %16 = tpu.matmul %15, %14, %cst_14 {dimension_numbers = #tpu.dot_dimension_numbers<[1], [0], [0], [1], [0, 0, 1, 1], [], []>} : vector<3x32xf32>, vector<32x128xf32>, vector<3x128xf32> -> vector<3x128xf32>
    %c0_15 = arith.constant 0 : index
    %c0_16 = arith.constant 0 : index
    %17 = vector.load %arg7[%c0_15, %c0_16] : memref<3x1xf32, #tpu.memory_space<vmem>>, vector<3x1xf32>
    %18 = vector.broadcast %17 : vector<3x1xf32> to vector<3x128xf32>
    %19 = arith.addf %16, %18 : vector<3x128xf32>
    %c0_17 = arith.constant 0 : index
    %c0_18 = arith.constant 0 : index
    %20 = vector.load %arg8[%c0_17, %c0_18] : memref<3x128xf32, #tpu.memory_space<vmem>>, vector<3x128xf32>
    tpu.vector_store %arg8[%c0_17, %c0_18], %19 {strides = array<i32>} : memref<3x128xf32, #tpu.memory_space<vmem>>, vector<3x128xf32>,
    return
  }
  func.func @transform_0(%arg0: i32) -> (i32, i32) {
    %c0_i32 = arith.constant 0 : i32
    %c0_i32_0 = arith.constant 0 : i32
    return %c0_i32, %arg0 : i32, i32
  }
  func.func @transform_1(%arg0: i32) -> (i32, i32) {
    %c0_i32 = arith.constant 0 : i32
    %c0_i32_0 = arith.constant 0 : i32
    %c0_i32_1 = arith.constant 0 : i32
    return %c0_i32, %c0_i32_0 : i32, i32
  }
  func.func @transform_2(%arg0: i32) -> (i32, i32) {
    %c0_i32 = arith.constant 0 : i32
    %c0_i32_0 = arith.constant 0 : i32
    %c0_i32_1 = arith.constant 0 : i32
    return %c0_i32, %c0_i32_0 : i32, i32
  }
  func.func @transform_3(%arg0: i32) -> (i32, i32) {
    %c0_i32 = arith.constant 0 : i32
    %c0_i32_0 = arith.constant 0 : i32
    %c0_i32_1 = arith.constant 0 : i32
    return %c0_i32, %c0_i32_0 : i32, i32
  }
  func.func @transform_4(%arg0: i32) -> (i32, i32) {
    %c0_i32 = arith.constant 0 : i32
    %c0_i32_0 = arith.constant 0 : i32
    %c0_i32_1 = arith.constant 0 : i32
    return %c0_i32, %c0_i32_0 : i32, i32
  }
  func.func @transform_5(%arg0: i32) -> (i32, i32) {
    %c0_i32 = arith.constant 0 : i32
    %c0_i32_0 = arith.constant 0 : i32
    %c0_i32_1 = arith.constant 0 : i32
    return %c0_i32, %c0_i32_0 : i32, i32
  }
  func.func @transform_6(%arg0: i32) -> (i32, i32) {
    %c0_i32 = arith.constant 0 : i32
    %c0_i32_0 = arith.constant 0 : i32
    %c0_i32_1 = arith.constant 0 : i32
    return %c0_i32, %c0_i32_0 : i32, i32
  }
  func.func @transform_7(%arg0: i32) -> (i32, i32) {
    %c0_i32 = arith.constant 0 : i32
    %c0_i32_0 = arith.constant 0 : i32
    return %c0_i32, %arg0 : i32, i32
  }
}

</mosaic_0001>

<llo_original>
// kernel: tpu_custom_call.1
$region0: #{tpu_custom_call.1}
  #allocation0 [shape = 'u32[]', space=smem, size = 0x4, offset = 0x4, fixed_abs, tag = 'smem constant byte address 0x4 - core index']
  #allocation1 [shape = 'u32[72,128]{1,0:T(1,128)}', space=vmem, size = 0x9000, scoped, tag = 'internal scratch']
  %s0 = inlined_call_operand.vmem [shape: f32[8,128], index: 0, kind: input, shape index: {}]
  %s1 = inlined_call_operand.vmem [shape: f32[64,8], index: 1, kind: input, shape index: {}]
  %s2 = inlined_call_operand.vmem [shape: f32[64,1], index: 2, kind: input, shape index: {}]
  %s3 = inlined_call_operand.vmem [shape: f32[32,64], index: 3, kind: input, shape index: {}]
  %s4 = inlined_call_operand.vmem [shape: f32[32,1], index: 4, kind: input, shape index: {}]
  %s5 = inlined_call_operand.vmem [shape: f32[3,32], index: 5, kind: input, shape index: {}]
  %s6 = inlined_call_operand.vmem [shape: f32[3,1], index: 6, kind: input, shape index: {}]
  %s7 = inlined_call_operand.hbm [shape: f32[3,128], index: 7, kind: output, shape index: {}]
  %s8 = sld [smem:[#allocation0]]
  $region38: #{tpu_custom_call.1} parent=0
    _
  %s10 = ssub.s32 1, %s8
  %s11 = scalar_select 0, %s10, %s8
  $region1: #{tpu_custom_call.1} parent=0
    #allocation2 [shape = 'u8[2048]{0}', space=vmem, size = 0x800, scoped, tag = 'output window, operand 0, single buffered']
    #allocation3 [shape = 's32[1]{0}', space=sflag, size = 0x4, scoped, tag = 'scoped memory for tpu_custom_call.1']
    %12 = vsyncpa [#allocation3], 0
    // Predicated region
    $region2: #{tpu_custom_call.1} parent=1 // pred_check
      _
    $region3: #{tpu_custom_call.1} parent=1 // pred_check_branch
      %14 = sbr.rel (0) target = $region5
    $region4: #{tpu_custom_call.1} parent=1 // pred_region
      _
    $region5: #{tpu_custom_call.1} parent=1 // pred_fallthru
      _
    // Predicated region
    $region6: #{tpu_custom_call.1} parent=1 // pred_check
      _
    $region7: #{tpu_custom_call.1} parent=1 // pred_check_branch
      %16 = sbr.rel (0) target = $region9
    $region8: #{tpu_custom_call.1} parent=1 // pred_region
      _
    $region9: #{tpu_custom_call.1} parent=1 // pred_fallthru
      _
    // Predicated region
    $region10: #{tpu_custom_call.1} parent=1 // pred_check
      _
    $region11: #{tpu_custom_call.1} parent=1 // pred_check_branch
      %18 = sbr.rel (0) target = $region13
    $region12: #{tpu_custom_call.1} parent=1 // pred_region
      _
    $region13: #{tpu_custom_call.1} parent=1 // pred_fallthru
      _
    // Predicated region
    $region14: #{tpu_custom_call.1} parent=1 // pred_check
      _
    $region15: #{tpu_custom_call.1} parent=1 // pred_check_branch
      %20 = sbr.rel (0) target = $region17
    $region16: #{tpu_custom_call.1} parent=1 // pred_region
      _
    $region17: #{tpu_custom_call.1} parent=1 // pred_fallthru
      _
    // Predicated region
    $region18: #{tpu_custom_call.1} parent=1 // pred_check
      _
    $region19: #{tpu_custom_call.1} parent=1 // pred_check_branch
      %22 = sbr.rel (0) target = $region21
    $region20: #{tpu_custom_call.1} parent=1 // pred_region
      _
    $region21: #{tpu_custom_call.1} parent=1 // pred_fallthru
      _
    // Predicated region
    $region22: #{tpu_custom_call.1} parent=1 // pred_check
      _
    $region23: #{tpu_custom_call.1} parent=1 // pred_check_branch
      %24 = sbr.rel (0) target = $region25
    $region24: #{tpu_custom_call.1} parent=1 // pred_region
      _
    $region25: #{tpu_custom_call.1} parent=1 // pred_fallthru
      _
    // Predicated region
    $region26: #{tpu_custom_call.1} parent=1 // pred_check
      _
    $region27: #{tpu_custom_call.1} parent=1 // pred_check_branch
      %26 = sbr.rel (0) target = $region29
    $region28: #{tpu_custom_call.1} parent=1 // pred_region
      _
    $region29: #{tpu_custom_call.1} parent=1 // pred_fallthru
      _
    %v27 = vld [vmem:[%s1] sm:$0xff]
    %v28 = vld [vmem:[%s1 + $0x8] sm:$0xff]
    %v29 = vld [vmem:[%s1 + $0x10] sm:$0xff]
    %v30 = vld [vmem:[%s1 + $0x18] sm:$0xff]
    %v31 = vld [vmem:[%s1 + $0x20] sm:$0xff]
    %v32 = vld [vmem:[%s1 + $0x28] sm:$0xff]
    %v33 = vld [vmem:[%s1 + $0x30] sm:$0xff]
    %v34 = vld [vmem:[%s1 + $0x38] sm:$0xff]
    %v35 = vld [vmem:[%s0] sm:$0xff]
    %v36 = vld [vmem:[%s2] sm:$0xff]
    %v37 = vld [vmem:[%s2 + $0x8] sm:$0xff]
    %v38 = vld [vmem:[%s2 + $0x10] sm:$0xff]
    %v39 = vld [vmem:[%s2 + $0x18] sm:$0xff]
    %v40 = vld [vmem:[%s2 + $0x20] sm:$0xff]
    %v41 = vld [vmem:[%s2 + $0x28] sm:$0xff]
    %v42 = vld [vmem:[%s2 + $0x30] sm:$0xff]
    %v43 = vld [vmem:[%s2 + $0x38] sm:$0xff]
    %45 = vset.pattern.permute.xlu0 0
    %46 = vperm.xlu0 %45, %v36
    %v47 = vpop.permute.xlu0 %46
    %50 = vset.pattern.permute.xlu0 0
    %51 = vperm.xlu0 %50, %v37
    %v52 = vpop.permute.xlu0 %51
    %55 = vset.pattern.permute.xlu0 0
    %56 = vperm.xlu0 %55, %v38
    %v57 = vpop.permute.xlu0 %56
    %60 = vset.pattern.permute.xlu0 0
    %61 = vperm.xlu0 %60, %v39
    %v62 = vpop.permute.xlu0 %61
    %65 = vset.pattern.permute.xlu0 0
    %66 = vperm.xlu0 %65, %v40
    %v67 = vpop.permute.xlu0 %66
    %70 = vset.pattern.permute.xlu0 0
    %71 = vperm.xlu0 %70, %v41
    %v72 = vpop.permute.xlu0 %71
    %75 = vset.pattern.permute.xlu0 0
    %76 = vperm.xlu0 %75, %v42
    %v77 = vpop.permute.xlu0 %76
    %80 = vset.pattern.permute.xlu0 0
    %81 = vperm.xlu0 %80, %v43
    %v82 = vpop.permute.xlu0 %81
    %vm84 = vcmask 64512
    %v86 = vsel %vm84, %v27, 0
    %v89 = vsel %vm84, %v28, 0
    %v92 = vsel %vm84, %v29, 0
    %v95 = vsel %vm84, %v30, 0
    %v98 = vsel %vm84, %v31, 0
    %v101 = vsel %vm84, %v32, 0
    %v104 = vsel %vm84, %v33, 0
    %v107 = vsel %vm84, %v34, 0
    %109 = vmatpush.msra.mxu0 0.0
    %110 = vmatpush.msra.mxu0 0.0
    %111 = vmatpush.msra.mxu0 0.0
    %112 = vmatpush.msra.mxu0 0.0
    %113 = vmatpush.msra.mxu0 0.0
    %114 = vmatpush.msra.mxu0 0.0
    %115 = vmatpush.msra.mxu0 0.0
    %116 = vmatpush.msra.mxu0 0.0
    %117 = vmatpush.msra.mxu0 0.0
    %118 = vmatpush.msra.mxu0 0.0
    %119 = vmatpush.msra.mxu0 0.0
    %120 = vmatpush.msra.mxu0 0.0
    %121 = vmatpush.msra.mxu0 0.0
    %122 = vmatpush.msra.mxu0 0.0
    %123 = vmatpush.msra.mxu0 0.0
    %124 = vmatpush.msra.mxu0 %v35
    %125 = vmatmul.f32.gmra.mxu0 %v86
    %v126 = vpop.f32.mrf.mxu0
    %v127 = vadd.f32 %v47, %v126
    %128 = vmatmul.f32.gmra.mxu0 %v89
    %v129 = vpop.f32.mrf.mxu0
    %v130 = vadd.f32 %v52, %v129
    %131 = vmatmul.f32.gmra.mxu0 %v92
    %v132 = vpop.f32.mrf.mxu0
    %v133 = vadd.f32 %v57, %v132
    %134 = vmatmul.f32.gmra.mxu0 %v95
    %v135 = vpop.f32.mrf.mxu0
    %v136 = vadd.f32 %v62, %v135
    %137 = vmatmul.f32.gmra.mxu0 %v98
    %v138 = vpop.f32.mrf.mxu0
    %v139 = vadd.f32 %v67, %v138
    %140 = vmatmul.f32.gmra.mxu0 %v101
    %v141 = vpop.f32.mrf.mxu0
    %v142 = vadd.f32 %v72, %v141
    %143 = vmatmul.f32.gmra.mxu0 %v104
    %v144 = vpop.f32.mrf.mxu0
    %v145 = vadd.f32 %v77, %v144
    %146 = vmatmul.f32.gmra.mxu0 %v107
    %v147 = vpop.f32.mrf.mxu0
    %v148 = vadd.f32 %v82, %v147
    %149 = vdwg.mxu0
    %v150 = vmax.f32 %v127, 0.0
    %v151 = vmax.f32 %v130, 0.0
    %v152 = vmax.f32 %v133, 0.0
    %v153 = vmax.f32 %v136, 0.0
    %v154 = vmax.f32 %v139, 0.0
    %v155 = vmax.f32 %v142, 0.0
    %v156 = vmax.f32 %v145, 0.0
    %v157 = vmax.f32 %v148, 0.0
    %v158 = vld [vmem:[%s3] sm:$0xff]
    %v159 = vld [vmem:[%s3 + $0x8] sm:$0xff]
    %v160 = vld [vmem:[%s3 + $0x10] sm:$0xff]
    %v161 = vld [vmem:[%s3 + $0x18] sm:$0xff]
    %v162 = vld [vmem:[%s4] sm:$0xff]
    %v163 = vld [vmem:[%s4 + $0x8] sm:$0xff]
    %v164 = vld [vmem:[%s4 + $0x10] sm:$0xff]
    %v165 = vld [vmem:[%s4 + $0x18] sm:$0xff]
    %167 = vset.pattern.permute.xlu0 0
    %168 = vperm.xlu0 %167, %v162
    %v169 = vpop.permute.xlu0 %168
    %172 = vset.pattern.permute.xlu0 0
    %173 = vperm.xlu0 %172, %v163
    %v174 = vpop.permute.xlu0 %173
    %177 = vset.pattern.permute.xlu0 0
    %178 = vperm.xlu0 %177, %v164
    %v179 = vpop.permute.xlu0 %178
    %182 = vset.pattern.permute.xlu0 0
    %183 = vperm.xlu0 %182, %v165
    %v184 = vpop.permute.xlu0 %183
    %vm186 = vcmask 523264
    %v188 = vsel %vm186, %v158, 0
    %v191 = vsel %vm186, %v159, 0
    %v194 = vsel %vm186, %v160, 0
    %v197 = vsel %vm186, %v161, 0
    %199 = vmatpush.msra.mxu0 0.0
    %200 = vmatpush.msra.mxu0 0.0
    %201 = vmatpush.msra.mxu0 0.0
    %202 = vmatpush.msra.mxu0 0.0
    %203 = vmatpush.msra.mxu0 0.0
    %204 = vmatpush.msra.mxu0 0.0
    %205 = vmatpush.msra.mxu0 0.0
    %206 = vmatpush.msra.mxu0 0.0
    %207 = vmatpush.msra.mxu0 %v157
    %208 = vmatpush.msra.mxu0 %v156
    %209 = vmatpush.msra.mxu0 %v155
    %210 = vmatpush.msra.mxu0 %v154
    %211 = vmatpush.msra.mxu0 %v153
    %212 = vmatpush.msra.mxu0 %v152
    %213 = vmatpush.msra.mxu0 %v151
    %214 = vmatpush.msra.mxu0 %v150
    %215 = vmatmul.f32.gmra.mxu0 %v188
    %v216 = vpop.f32.mrf.mxu0
    %v217 = vadd.f32 %v169, %v216
    %218 = vmatmul.f32.gmra.mxu0 %v191
    %v219 = vpop.f32.mrf.mxu0
    %v220 = vadd.f32 %v174, %v219
    %221 = vmatmul.f32.gmra.mxu0 %v194
    %v222 = vpop.f32.mrf.mxu0
    %v223 = vadd.f32 %v179, %v222
    %224 = vmatmul.f32.gmra.mxu0 %v197
    %v225 = vpop.f32.mrf.mxu0
    %v226 = vadd.f32 %v184, %v225
    %227 = vdwg.mxu0
    %v228 = vmax.f32 %v217, 0.0
    %v229 = vmax.f32 %v220, 0.0
    %v230 = vmax.f32 %v223, 0.0
    %v231 = vmax.f32 %v226, 0.0
    %v232 = vld [vmem:[%s5] sm:$0x7]
    %v233 = vld [vmem:[%s6] sm:$0x7]
    %235 = vset.pattern.permute.xlu0 0
    %236 = vperm.xlu0 %235, %v233
    %v237 = vpop.permute.xlu0 %236
    %vm239 = vcmask 261120
    %v241 = vsel %vm239, %v232, 0
    %243 = vmatpush.msra.mxu0 0.0
    %244 = vmatpush.msra.mxu0 0.0
    %245 = vmatpush.msra.mxu0 0.0
    %246 = vmatpush.msra.mxu0 0.0
    %247 = vmatpush.msra.mxu0 0.0
    %248 = vmatpush.msra.mxu0 0.0
    %249 = vmatpush.msra.mxu0 0.0
    %250 = vmatpush.msra.mxu0 0.0
    %251 = vmatpush.msra.mxu0 0.0
    %252 = vmatpush.msra.mxu0 0.0
    %253 = vmatpush.msra.mxu0 0.0
    %254 = vmatpush.msra.mxu0 0.0
    %255 = vmatpush.msra.mxu0 %v231
    %256 = vmatpush.msra.mxu0 %v230
    %257 = vmatpush.msra.mxu0 %v229
    %258 = vmatpush.msra.mxu0 %v228
    %259 = vmatmul.f32.gmra.mxu0 %v241
    %v260 = vpop.f32.mrf.mxu0
    %v261 = vadd.f32 %v237, %v260
    %262 = vdwg.mxu0
    %263 = vst [vmem:[#allocation2] sm:$0x7] %v261
    // Predicated region
    $region30: #{tpu_custom_call.1} parent=1 // pred_check
      _
    $region31: #{tpu_custom_call.1} parent=1 // pred_check_branch
      %265 = sbr.rel (0) target = $region33
    $region32: #{tpu_custom_call.1} parent=1 // pred_region
      %267 = vsyncadd [#allocation3], 0
      %s269 = sshll.u32 [#allocation2], 4
      %s270 = int_to_ptr.vmem [resolvable:$true] %s269
      %s271 = sshll.u32 %s7, 4
      %s272 = int_to_ptr.hbm [resolvable:$true] %s271
      %274 = dma.vmem_to_hbm [thread:$0]  %s270, 64, %s272, [#allocation3]
    $region33: #{tpu_custom_call.1} parent=1 // pred_fallthru
      _
    // Predicated region
    $region34: #{tpu_custom_call.1} parent=1 // pred_check
      _
    $region35: #{tpu_custom_call.1} parent=1 // pred_check_branch
      %276 = sbr.rel (0) target = $region37
    $region36: #{tpu_custom_call.1} parent=1 // pred_region
      %278 = dma.done [#allocation3], 64
    $region37: #{tpu_custom_call.1} parent=1 // pred_fallthru
      _
    %279 = vsyncpa [#allocation3], 1

</llo_original>
